<compile_context>
chip_gen: v5e
topology: v5e:2x2
jax: 0.10.0
libtpu: 0.0.40
codegen_flags: <defaults>
</compile_context>

<pallas_src>
import functools

import jax
import jax.numpy as jnp
from jax.experimental import pallas as pl
from jax.experimental.pallas import tpu as pltpu


NUM_CLASSES = 10
HIDDEN_PAD = 128        # lane-padded width for the 10-wide hidden layers
DEFAULT_TB = 2048       # max batch tile (~22 MiB footprint; fits v7x's 64 MiB VMEM)


def _round_up(x, m):
    return (x + m - 1) // m * m


def _mlp_kernel(x_ref,
                w0_ref, b0_ref,
                w1_ref, b1_ref,
                w2_ref, b2_ref,
                w3_ref, b3_ref,
                w4_ref, b4_ref,
                w5_ref, b5_ref,
                out_ref):
    """Fused forward for one batch tile: 5x(Linear+ReLU) + Linear + log_softmax."""

    def layer(h, w_ref, b_ref, relu=True):
        acc = jnp.dot(h, w_ref[...], preferred_element_type=jnp.float32)
        acc = acc + b_ref[...]                       # bias is f32, shape (1, N)
        if relu:
            acc = jnp.maximum(acc, 0.0)
        return acc

    # Layer 0 carries the dominant FLOPs: bf16 operands on the MXU, f32 accumulate.
    x = x_ref[...].astype(jnp.bfloat16)              # (TB, 784), cast in-kernel
    h = layer(x, w0_ref, b0_ref)                     # (TB, 128) f32

    # Tiny tail layers: pure f32 (HBM-bound kernel -> extra MXU passes are free,
    # and we avoid re-quantizing activations to bf16 between layers).
    h = layer(h, w1_ref, b1_ref)                     # (TB, 64)
    h = layer(h, w2_ref, b2_ref)                     # (TB, 128), cols 10.. are 0
    h = layer(h, w3_ref, b3_ref)                     # (TB, 128)
    h = layer(h, w4_ref, b4_ref)                     # (TB, 128)
    logits = layer(h, w5_ref, b5_ref, relu=False)    # (TB, 10) f32, unpadded

    # log_softmax over the 10 real classes (no padded lanes to mask).
    m = jnp.max(logits, axis=-1, keepdims=True)
    shifted = logits - m
    lse = jnp.log(jnp.sum(jnp.exp(shifted), axis=-1, keepdims=True))
    out_ref[...] = (shifted - lse).astype(out_ref.dtype)   # narrow (TB, 10) store


@functools.partial(jax.jit, static_argnames=("image_size",))
def neural_network_d_forward(x, params, *, image_size):
    """x: any shape whose trailing dims flatten to image_size (e.g. NCHW images)."""
    xf = x.reshape(-1, image_size).astype(jnp.float32)
    batch = xf.shape[0]

    # Batch tile: >=2 grid steps whenever batch >= 16 (both v7x TCs get work),
    # multiple of 8 (f32 sublane tile), capped so VMEM stays comfortable.
    tb = min(DEFAULT_TB, max(8, _round_up(pl.cdiv(batch, 2), 8)))
    grid = (pl.cdiv(batch, tb),)

    # Per-layer padded widths. Only the 10-wide *hidden* dims are padded to 128
    # (zero rows/cols keep the math exact); the input K stays 784 and the final
    # output width stays 10.
    dims_in = [image_size, 128, 64, HIDDEN_PAD, HIDDEN_PAD, HIDDEN_PAD]
    dims_out = [128, 64, HIDDEN_PAD, HIDDEN_PAD, HIDDEN_PAD, NUM_CLASSES]

    args = [xf]
    for i, (w, b) in enumerate(params):
        w32 = jnp.asarray(w, jnp.float32)               # (in, out)
        b32 = jnp.asarray(b, jnp.float32).reshape(1, -1)
        pin, pout = dims_in[i], dims_out[i]
        wp = jnp.zeros((pin, pout), jnp.float32).at[:w32.shape[0], :w32.shape[1]].set(w32)
        bp = jnp.zeros((1, pout), jnp.float32).at[:, :b32.shape[1]].set(b32)
        if i == 0:
            wp = wp.astype(jnp.bfloat16)                # layer-0 MXU operand
        args.append(wp)
        args.append(bp)                                 # biases stay f32

    # x tile walks the batch grid; weights/biases use constant index maps so
    # they are DMA'd once and stay resident in VMEM across all grid steps.
    in_specs = [pl.BlockSpec((tb, image_size), lambda i: (i, 0))]
    for a in args[1:]:
        in_specs.append(pl.BlockSpec(a.shape, lambda i: (0, 0)))

    out = pl.pallas_call(
        _mlp_kernel,
        out_shape=jax.ShapeDtypeStruct((batch, NUM_CLASSES), jnp.float32),
        grid=grid,
        in_specs=in_specs,
        out_specs=pl.BlockSpec((tb, NUM_CLASSES), lambda i: (i, 0)),
        compiler_params=pltpu.CompilerParams(
            dimension_semantics=("parallel",),
            vmem_limit_bytes=48 * 1024 * 1024,
        ),
    )(*args)

    return out


def init_params(key, image_size):
    """Deterministic init mimicking nn.Linear default U(-1/sqrt(in), 1/sqrt(in)).

    Returns list of (W, b) with W already transposed to (in_features, out_features).
    """
    dims = [image_size, 128, 64, 10, 10, 10, 10]
    params = []
    for i in range(len(dims) - 1):
        fan_in, fan_out = dims[i], dims[i + 1]
        key, kw, kb = jax.random.split(key, 3)
        bound = 1.0 / (fan_in ** 0.5)
        w = jax.random.uniform(kw, (fan_in, fan_out), jnp.float32, -bound, bound)
        b = jax.random.uniform(kb, (fan_out,), jnp.float32, -bound, bound)
        params.append((w, b))
    return params


def _reference_forward(x, params, image_size):
    """Pure-JAX f32 reference of the PyTorch forward (for a sanity check)."""
    h = x.reshape(-1, image_size).astype(jnp.float32)
    for li, (w, b) in enumerate(params):
        h = h @ w + b
        if li < len(params) - 1:
            h = jnp.maximum(h, 0.0)
    m = jnp.max(h, axis=-1, keepdims=True)
    s = h - m
    return s - jnp.log(jnp.sum(jnp.exp(s), axis=-1, keepdims=True))


if __name__ == "__main__":
    IMAGE_SIZE = 28 * 28  # MNIST-style input
    BATCH = 8

    key = jax.random.PRNGKey(0)
    key, kx = jax.random.split(key)
    # NCHW image input, as a PyTorch DataLoader would provide.
    x = jax.random.normal(kx, (BATCH, 1, 28, 28), dtype=jnp.float32)

    params = init_params(key, IMAGE_SIZE)

    out = neural_network_d_forward(x, params, image_size=IMAGE_SIZE)
    out = jax.block_until_ready(out)

    assert out.shape == (BATCH, NUM_CLASSES)

    # log_softmax rows should sum to 1 in probability space.
    row_prob_sum = jnp.sum(jnp.exp(out), axis=1)
    assert jnp.allclose(row_prob_sum, jnp.ones_like(row_prob_sum), atol=1e-4)

    # Sanity check vs an all-f32 reference (only layer 0 uses bf16 operands now,
    # so the tolerance can be tighter than before).
    ref = _reference_forward(x, params, IMAGE_SIZE)
    assert jnp.allclose(out, ref, atol=5e-2), float(jnp.max(jnp.abs(out - ref)))

    print("KERNEL_OK")
</pallas_src>

<mosaic_0001>
module attributes {stable_mosaic.version = 11 : i64} {
  func.func @_mlp_kernel(%arg0: i32, %arg1: memref<8x784xf32, #tpu.memory_space<vmem>>, %arg2: memref<784x128xbf16, #tpu.memory_space<vmem>>, %arg3: memref<1x128xf32, #tpu.memory_space<vmem>>, %arg4: memref<128x64xf32, #tpu.memory_space<vmem>>, %arg5: memref<1x64xf32, #tpu.memory_space<vmem>>, %arg6: memref<64x128xf32, #tpu.memory_space<vmem>>, %arg7: memref<1x128xf32, #tpu.memory_space<vmem>>, %arg8: memref<128x128xf32, #tpu.memory_space<vmem>>, %arg9: memref<1x128xf32, #tpu.memory_space<vmem>>, %arg10: memref<128x128xf32, #tpu.memory_space<vmem>>, %arg11: memref<1x128xf32, #tpu.memory_space<vmem>>, %arg12: memref<128x10xf32, #tpu.memory_space<vmem>>, %arg13: memref<1x10xf32, #tpu.memory_space<vmem>>, %arg14: memref<8x10xf32, #tpu.memory_space<vmem>>) attributes {dimension_semantics = [#tpu.dimension_semantics<parallel>], iteration_bounds = array<i64: 1>, scalar_prefetch = 0 : i64, scratch_operands = 0 : i64, tpu.core_type = #tpu.core_type<tc>, window_params = [{transform_indices = @transform_0, window_bounds = array<i64: 8, 784>}, {pipeline_mode = #tpu.pipeline_mode<synchronous>, transform_indices = @transform_1, window_bounds = array<i64: 784, 128>}, {pipeline_mode = #tpu.pipeline_mode<synchronous>, transform_indices = @transform_2, window_bounds = array<i64: 1, 128>}, {pipeline_mode = #tpu.pipeline_mode<synchronous>, transform_indices = @transform_3, window_bounds = array<i64: 128, 64>}, {pipeline_mode = #tpu.pipeline_mode<synchronous>, transform_indices = @transform_4, window_bounds = array<i64: 1, 64>}, {pipeline_mode = #tpu.pipeline_mode<synchronous>, transform_indices = @transform_5, window_bounds = array<i64: 64, 128>}, {pipeline_mode = #tpu.pipeline_mode<synchronous>, transform_indices = @transform_6, window_bounds = array<i64: 1, 128>}, {pipeline_mode = #tpu.pipeline_mode<synchronous>, transform_indices = @transform_7, window_bounds = array<i64: 128, 128>}, {pipeline_mode = #tpu.pipeline_mode<synchronous>, transform_indices = @transform_8, window_bounds = array<i64: 1, 128>}, {pipeline_mode = #tpu.pipeline_mode<synchronous>, transform_indices = @transform_9, window_bounds = array<i64: 128, 128>}, {pipeline_mode = #tpu.pipeline_mode<synchronous>, transform_indices = @transform_10, window_bounds = array<i64: 1, 128>}, {pipeline_mode = #tpu.pipeline_mode<synchronous>, transform_indices = @transform_11, window_bounds = array<i64: 128, 10>}, {pipeline_mode = #tpu.pipeline_mode<synchronous>, transform_indices = @transform_12, window_bounds = array<i64: 1, 10>}, {transform_indices = @transform_13, window_bounds = array<i64: 8, 10>}]} {
    %c0 = arith.constant 0 : index
    %c0_0 = arith.constant 0 : index
    %0 = vector.load %arg1[%c0, %c0_0] : memref<8x784xf32, #tpu.memory_space<vmem>>, vector<8x784xf32>
    %1 = arith.truncf %0 : vector<8x784xf32> to vector<8x784xbf16>
    %c0_1 = arith.constant 0 : index
    %c0_2 = arith.constant 0 : index
    %2 = vector.load %arg2[%c0_1, %c0_2] : memref<784x128xbf16, #tpu.memory_space<vmem>>, vector<784x128xbf16>
    %cst = arith.constant dense<0.000000e+00> : vector<8x128xf32>
    %3 = tpu.matmul %1, %2, %cst {dimension_numbers = #tpu.dot_dimension_numbers<[1], [0], [0], [1], [0, 0, 1, 1], [], []>} : vector<8x784xbf16>, vector<784x128xbf16>, vector<8x128xf32> -> vector<8x128xf32>
    %c0_3 = arith.constant 0 : index
    %c0_4 = arith.constant 0 : index
    %4 = vector.load %arg3[%c0_3, %c0_4] : memref<1x128xf32, #tpu.memory_space<vmem>>, vector<1x128xf32>
    %5 = vector.broadcast %4 : vector<1x128xf32> to vector<8x128xf32>
    %6 = arith.addf %3, %5 : vector<8x128xf32>
    %cst_5 = arith.constant 0.000000e+00 : f32
    %7 = vector.broadcast %cst_5 : f32 to vector<8x128xf32>
    %8 = arith.maximumf %6, %7 : vector<8x128xf32>
    %c0_6 = arith.constant 0 : index
    %c0_7 = arith.constant 0 : index
    %9 = vector.load %arg4[%c0_6, %c0_7] : memref<128x64xf32, #tpu.memory_space<vmem>>, vector<128x64xf32>
    %cst_8 = arith.constant dense<0.000000e+00> : vector<8x64xf32>
    %10 = tpu.matmul %8, %9, %cst_8 {dimension_numbers = #tpu.dot_dimension_numbers<[1], [0], [0], [1], [0, 0, 1, 1], [], []>} : vector<8x128xf32>, vector<128x64xf32>, vector<8x64xf32> -> vector<8x64xf32>
    %c0_9 = arith.constant 0 : index
    %c0_10 = arith.constant 0 : index
    %11 = vector.load %arg5[%c0_9, %c0_10] : memref<1x64xf32, #tpu.memory_space<vmem>>, vector<1x64xf32>
    %12 = vector.broadcast %11 : vector<1x64xf32> to vector<8x64xf32>
    %13 = arith.addf %10, %12 : vector<8x64xf32>
    %cst_11 = arith.constant 0.000000e+00 : f32
    %14 = vector.broadcast %cst_11 : f32 to vector<8x64xf32>
    %15 = arith.maximumf %13, %14 : vector<8x64xf32>
    %c0_12 = arith.constant 0 : index
    %c0_13 = arith.constant 0 : index
    %16 = vector.load %arg6[%c0_12, %c0_13] : memref<64x128xf32, #tpu.memory_space<vmem>>, vector<64x128xf32>
    %cst_14 = arith.constant dense<0.000000e+00> : vector<8x128xf32>
    %17 = tpu.matmul %15, %16, %cst_14 {dimension_numbers = #tpu.dot_dimension_numbers<[1], [0], [0], [1], [0, 0, 1, 1], [], []>} : vector<8x64xf32>, vector<64x128xf32>, vector<8x128xf32> -> vector<8x128xf32>
    %c0_15 = arith.constant 0 : index
    %c0_16 = arith.constant 0 : index
    %18 = vector.load %arg7[%c0_15, %c0_16] : memref<1x128xf32, #tpu.memory_space<vmem>>, vector<1x128xf32>
    %19 = vector.broadcast %18 : vector<1x128xf32> to vector<8x128xf32>
    %20 = arith.addf %17, %19 : vector<8x128xf32>
    %cst_17 = arith.constant 0.000000e+00 : f32
    %21 = vector.broadcast %cst_17 : f32 to vector<8x128xf32>
    %22 = arith.maximumf %20, %21 : vector<8x128xf32>
    %c0_18 = arith.constant 0 : index
    %c0_19 = arith.constant 0 : index
    %23 = vector.load %arg8[%c0_18, %c0_19] : memref<128x128xf32, #tpu.memory_space<vmem>>, vector<128x128xf32>
    %cst_20 = arith.constant dense<0.000000e+00> : vector<8x128xf32>
    %24 = tpu.matmul %22, %23, %cst_20 {dimension_numbers = #tpu.dot_dimension_numbers<[1], [0], [0], [1], [0, 0, 1, 1], [], []>} : vector<8x128xf32>, vector<128x128xf32>, vector<8x128xf32> -> vector<8x128xf32>
    %c0_21 = arith.constant 0 : index
    %c0_22 = arith.constant 0 : index
    %25 = vector.load %arg9[%c0_21, %c0_22] : memref<1x128xf32, #tpu.memory_space<vmem>>, vector<1x128xf32>
    %26 = vector.broadcast %25 : vector<1x128xf32> to vector<8x128xf32>
    %27 = arith.addf %24, %26 : vector<8x128xf32>
    %cst_23 = arith.constant 0.000000e+00 : f32
    %28 = vector.broadcast %cst_23 : f32 to vector<8x128xf32>
    %29 = arith.maximumf %27, %28 : vector<8x128xf32>
    %c0_24 = arith.constant 0 : index
    %c0_25 = arith.constant 0 : index
    %30 = vector.load %arg10[%c0_24, %c0_25] : memref<128x128xf32, #tpu.memory_space<vmem>>, vector<128x128xf32>
    %cst_26 = arith.constant dense<0.000000e+00> : vector<8x128xf32>
    %31 = tpu.matmul %29, %30, %cst_26 {dimension_numbers = #tpu.dot_dimension_numbers<[1], [0], [0], [1], [0, 0, 1, 1], [], []>} : vector<8x128xf32>, vector<128x128xf32>, vector<8x128xf32> -> vector<8x128xf32>
    %c0_27 = arith.constant 0 : index
    %c0_28 = arith.constant 0 : index
    %32 = vector.load %arg11[%c0_27, %c0_28] : memref<1x128xf32, #tpu.memory_space<vmem>>, vector<1x128xf32>
    %33 = vector.broadcast %32 : vector<1x128xf32> to vector<8x128xf32>
    %34 = arith.addf %31, %33 : vector<8x128xf32>
    %cst_29 = arith.constant 0.000000e+00 : f32
    %35 = vector.broadcast %cst_29 : f32 to vector<8x128xf32>
    %36 = arith.maximumf %34, %35 : vector<8x128xf32>
    %c0_30 = arith.constant 0 : index
    %c0_31 = arith.constant 0 : index
    %37 = vector.load %arg12[%c0_30, %c0_31] : memref<128x10xf32, #tpu.memory_space<vmem>>, vector<128x10xf32>
    %cst_32 = arith.constant dense<0.000000e+00> : vector<8x10xf32>
    %38 = tpu.matmul %36, %37, %cst_32 {dimension_numbers = #tpu.dot_dimension_numbers<[1], [0], [0], [1], [0, 0, 1, 1], [], []>} : vector<8x128xf32>, vector<128x10xf32>, vector<8x10xf32> -> vector<8x10xf32>
    %c0_33 = arith.constant 0 : index
    %c0_34 = arith.constant 0 : index
    %39 = vector.load %arg13[%c0_33, %c0_34] : memref<1x10xf32, #tpu.memory_space<vmem>>, vector<1x10xf32>
    %40 = vector.broadcast %39 : vector<1x10xf32> to vector<8x10xf32>
    %41 = arith.addf %38, %40 : vector<8x10xf32>
    %cst_35 = arith.constant dense<0xFF800000> : vector<8xf32>
    %42 = vector.multi_reduction <maximumf>, %41, %cst_35 [1] : vector<8x10xf32> to vector<8xf32>
    %43 = vector.shape_cast %42 : vector<8xf32> to vector<8x1xf32>
    %44 = vector.broadcast %43 : vector<8x1xf32> to vector<8x10xf32>
    %45 = arith.subf %41, %44 : vector<8x10xf32>
    %46 = math.exp %45 : vector<8x10xf32>
    %cst_36 = arith.constant dense<0.000000e+00> : vector<8xf32>
    %47 = vector.multi_reduction <add>, %46, %cst_36 [1] : vector<8x10xf32> to vector<8xf32>
    %48 = vector.shape_cast %47 : vector<8xf32> to vector<8x1xf32>
    %49 = math.log %48 : vector<8x1xf32>
    %50 = vector.broadcast %49 : vector<8x1xf32> to vector<8x10xf32>
    %51 = arith.subf %45, %50 : vector<8x10xf32>
    %c0_37 = arith.constant 0 : index
    %c0_38 = arith.constant 0 : index
    %52 = vector.load %arg14[%c0_37, %c0_38] : memref<8x10xf32, #tpu.memory_space<vmem>>, vector<8x10xf32>
    tpu.vector_store %arg14[%c0_37, %c0_38], %51 {strides = array<i32>} : memref<8x10xf32, #tpu.memory_space<vmem>>, vector<8x10xf32>,
    return
  }
  func.func @transform_0(%arg0: i32) -> (i32, i32) {
    %c0_i32 = arith.constant 0 : i32
    %c0_i32_0 = arith.constant 0 : i32
    return %arg0, %c0_i32 : i32, i32
  }
  func.func @transform_1(%arg0: i32) -> (i32, i32) {
    %c0_i32 = arith.constant 0 : i32
    %c0_i32_0 = arith.constant 0 : i32
    %c0_i32_1 = arith.constant 0 : i32
    return %c0_i32, %c0_i32_0 : i32, i32
  }
  func.func @transform_2(%arg0: i32) -> (i32, i32) {
    %c0_i32 = arith.constant 0 : i32
    %c0_i32_0 = arith.constant 0 : i32
    %c0_i32_1 = arith.constant 0 : i32
    return %c0_i32, %c0_i32_0 : i32, i32
  }
  func.func @transform_3(%arg0: i32) -> (i32, i32) {
    %c0_i32 = arith.constant 0 : i32
    %c0_i32_0 = arith.constant 0 : i32
    %c0_i32_1 = arith.constant 0 : i32
    return %c0_i32, %c0_i32_0 : i32, i32
  }
  func.func @transform_4(%arg0: i32) -> (i32, i32) {
    %c0_i32 = arith.constant 0 : i32
    %c0_i32_0 = arith.constant 0 : i32
    %c0_i32_1 = arith.constant 0 : i32
    return %c0_i32, %c0_i32_0 : i32, i32
  }
  func.func @transform_5(%arg0: i32) -> (i32, i32) {
    %c0_i32 = arith.constant 0 : i32
    %c0_i32_0 = arith.constant 0 : i32
    %c0_i32_1 = arith.constant 0 : i32
    return %c0_i32, %c0_i32_0 : i32, i32
  }
  func.func @transform_6(%arg0: i32) -> (i32, i32) {
    %c0_i32 = arith.constant 0 : i32
    %c0_i32_0 = arith.constant 0 : i32
    %c0_i32_1 = arith.constant 0 : i32
    return %c0_i32, %c0_i32_0 : i32, i32
  }
  func.func @transform_7(%arg0: i32) -> (i32, i32) {
    %c0_i32 = arith.constant 0 : i32
    %c0_i32_0 = arith.constant 0 : i32
    %c0_i32_1 = arith.constant 0 : i32
    return %c0_i32, %c0_i32_0 : i32, i32
  }
  func.func @transform_8(%arg0: i32) -> (i32, i32) {
    %c0_i32 = arith.constant 0 : i32
    %c0_i32_0 = arith.constant 0 : i32
    %c0_i32_1 = arith.constant 0 : i32
    return %c0_i32, %c0_i32_0 : i32, i32
  }
  func.func @transform_9(%arg0: i32) -> (i32, i32) {
    %c0_i32 = arith.constant 0 : i32
    %c0_i32_0 = arith.constant 0 : i32
    %c0_i32_1 = arith.constant 0 : i32
    return %c0_i32, %c0_i32_0 : i32, i32
  }
  func.func @transform_10(%arg0: i32) -> (i32, i32) {
    %c0_i32 = arith.constant 0 : i32
    %c0_i32_0 = arith.constant 0 : i32
    %c0_i32_1 = arith.constant 0 : i32
    return %c0_i32, %c0_i32_0 : i32, i32
  }
  func.func @transform_11(%arg0: i32) -> (i32, i32) {
    %c0_i32 = arith.constant 0 : i32
    %c0_i32_0 = arith.constant 0 : i32
    %c0_i32_1 = arith.constant 0 : i32
    return %c0_i32, %c0_i32_0 : i32, i32
  }
  func.func @transform_12(%arg0: i32) -> (i32, i32) {
    %c0_i32 = arith.constant 0 : i32
    %c0_i32_0 = arith.constant 0 : i32
    %c0_i32_1 = arith.constant 0 : i32
    return %c0_i32, %c0_i32_0 : i32, i32
  }
  func.func @transform_13(%arg0: i32) -> (i32, i32) {
    %c0_i32 = arith.constant 0 : i32
    %c0_i32_0 = arith.constant 0 : i32
    return %arg0, %c0_i32 : i32, i32
  }
}

</mosaic_0001>

<llo_original>
// kernel: neural_network_d_forward.1
$region0: #{neural_network_d_forward.1}
  #allocation0 [shape = 'u32[]', space=smem, size = 0x4, offset = 0x4, fixed_abs, tag = 'smem constant byte address 0x4 - core index']
  #allocation1 [shape = 'u32[72,128]{1,0:T(1,128)}', space=vmem, size = 0x9000, scoped, tag = 'internal scratch']
  %s0 = inlined_call_operand.vmem [shape: f32[8,784], index: 0, kind: input, shape index: {}]
  %s1 = inlined_call_operand.vmem [shape: bf16[784,128], index: 1, kind: input, shape index: {}]
  %s2 = inlined_call_operand.vmem [shape: f32[1,128], index: 2, kind: input, shape index: {}]
  %s3 = inlined_call_operand.vmem [shape: f32[128,64], index: 3, kind: input, shape index: {}]
  %s4 = inlined_call_operand.vmem [shape: f32[1,64], index: 4, kind: input, shape index: {}]
  %s5 = inlined_call_operand.vmem [shape: f32[64,128], index: 5, kind: input, shape index: {}]
  %s6 = inlined_call_operand.vmem [shape: f32[1,128], index: 6, kind: input, shape index: {}]
  %s7 = inlined_call_operand.vmem [shape: f32[128,128], index: 7, kind: input, shape index: {}]
  %s8 = inlined_call_operand.vmem [shape: f32[1,128], index: 8, kind: input, shape index: {}]
  %s9 = inlined_call_operand.vmem [shape: f32[128,128], index: 9, kind: input, shape index: {}]
  %s10 = inlined_call_operand.vmem [shape: f32[1,128], index: 10, kind: input, shape index: {}]
  %s11 = inlined_call_operand.vmem [shape: f32[128,10], index: 11, kind: input, shape index: {}]
  %s12 = inlined_call_operand.vmem [shape: f32[1,10], index: 12, kind: input, shape index: {}]
  %s13 = inlined_call_operand.hbm [shape: f32[8,10], index: 13, kind: output, shape index: {}]
  %s14 = sld [smem:[#allocation0]]
  $region62: #{neural_network_d_forward.1} parent=0
    _
  %s16 = ssub.s32 1, %s14
  %s17 = scalar_select 0, %s16, %s14
  $region1: #{neural_network_d_forward.1} parent=0
    #allocation2 [shape = 'u8[4096]{0}', space=vmem, size = 0x1000, scoped, tag = 'output window, operand 0, single buffered']
    #allocation3 [shape = 's32[1]{0}', space=sflag, size = 0x4, scoped, tag = 'scoped memory for neural_network_d_forward.1']
    %18 = vsyncpa [#allocation3], 0
    // Predicated region
    $region2: #{neural_network_d_forward.1} parent=1 // pred_check
      _
    $region3: #{neural_network_d_forward.1} parent=1 // pred_check_branch
      %20 = sbr.rel (0) target = $region5
    $region4: #{neural_network_d_forward.1} parent=1 // pred_region
      _
    $region5: #{neural_network_d_forward.1} parent=1 // pred_fallthru
      _
    // Predicated region
    $region6: #{neural_network_d_forward.1} parent=1 // pred_check
      _
    $region7: #{neural_network_d_forward.1} parent=1 // pred_check_branch
      %22 = sbr.rel (0) target = $region9
    $region8: #{neural_network_d_forward.1} parent=1 // pred_region
      _
    $region9: #{neural_network_d_forward.1} parent=1 // pred_fallthru
      _
    // Predicated region
    $region10: #{neural_network_d_forward.1} parent=1 // pred_check
      _
    $region11: #{neural_network_d_forward.1} parent=1 // pred_check_branch
      %24 = sbr.rel (0) target = $region13
    $region12: #{neural_network_d_forward.1} parent=1 // pred_region
      _
    $region13: #{neural_network_d_forward.1} parent=1 // pred_fallthru
      _
    // Predicated region
    $region14: #{neural_network_d_forward.1} parent=1 // pred_check
      _
    $region15: #{neural_network_d_forward.1} parent=1 // pred_check_branch
      %26 = sbr.rel (0) target = $region17
    $region16: #{neural_network_d_forward.1} parent=1 // pred_region
      _
    $region17: #{neural_network_d_forward.1} parent=1 // pred_fallthru
      _
    // Predicated region
    $region18: #{neural_network_d_forward.1} parent=1 // pred_check
      _
    $region19: #{neural_network_d_forward.1} parent=1 // pred_check_branch
      %28 = sbr.rel (0) target = $region21
    $region20: #{neural_network_d_forward.1} parent=1 // pred_region
      _
    $region21: #{neural_network_d_forward.1} parent=1 // pred_fallthru
      _
    // Predicated region
    $region22: #{neural_network_d_forward.1} parent=1 // pred_check
      _
    $region23: #{neural_network_d_forward.1} parent=1 // pred_check_branch
      %30 = sbr.rel (0) target = $region25
    $region24: #{neural_network_d_forward.1} parent=1 // pred_region
      _
    $region25: #{neural_network_d_forward.1} parent=1 // pred_fallthru
      _
    // Predicated region
    $region26: #{neural_network_d_forward.1} parent=1 // pred_check
      _
    $region27: #{neural_network_d_forward.1} parent=1 // pred_check_branch
      %32 = sbr.rel (0) target = $region29
    $region28: #{neural_network_d_forward.1} parent=1 // pred_region
      _
    $region29: #{neural_network_d_forward.1} parent=1 // pred_fallthru
      _
    // Predicated region
    $region30: #{neural_network_d_forward.1} parent=1 // pred_check
      _
    $region31: #{neural_network_d_forward.1} parent=1 // pred_check_branch
      %34 = sbr.rel (0) target = $region33
    $region32: #{neural_network_d_forward.1} parent=1 // pred_region
      _
    $region33: #{neural_network_d_forward.1} parent=1 // pred_fallthru
      _
    // Predicated region
    $region34: #{neural_network_d_forward.1} parent=1 // pred_check
      _
    $region35: #{neural_network_d_forward.1} parent=1 // pred_check_branch
      %36 = sbr.rel (0) target = $region37
    $region36: #{neural_network_d_forward.1} parent=1 // pred_region
      _
    $region37: #{neural_network_d_forward.1} parent=1 // pred_fallthru
      _
    // Predicated region
    $region38: #{neural_network_d_forward.1} parent=1 // pred_check
      _
    $region39: #{neural_network_d_forward.1} parent=1 // pred_check_branch
      %38 = sbr.rel (0) target = $region41
    $region40: #{neural_network_d_forward.1} parent=1 // pred_region
      _
    $region41: #{neural_network_d_forward.1} parent=1 // pred_fallthru
      _
    // Predicated region
    $region42: #{neural_network_d_forward.1} parent=1 // pred_check
      _
    $region43: #{neural_network_d_forward.1} parent=1 // pred_check_branch
      %40 = sbr.rel (0) target = $region45
    $region44: #{neural_network_d_forward.1} parent=1 // pred_region
      _
    $region45: #{neural_network_d_forward.1} parent=1 // pred_fallthru
      _
    // Predicated region
    $region46: #{neural_network_d_forward.1} parent=1 // pred_check
      _
    $region47: #{neural_network_d_forward.1} parent=1 // pred_check_branch
      %42 = sbr.rel (0) target = $region49
    $region48: #{neural_network_d_forward.1} parent=1 // pred_region
      _
    $region49: #{neural_network_d_forward.1} parent=1 // pred_fallthru
      _
    // Predicated region
    $region50: #{neural_network_d_forward.1} parent=1 // pred_check
      _
    $region51: #{neural_network_d_forward.1} parent=1 // pred_check_branch
      %44 = sbr.rel (0) target = $region53
    $region52: #{neural_network_d_forward.1} parent=1 // pred_region
      _
    $region53: #{neural_network_d_forward.1} parent=1 // pred_fallthru
      _
    %v46 = vld [vmem:[%s0] sm:$0xff]
    %v47 = vld [vmem:[%s0 + $0x8] sm:$0xff]
    %v48 = vld [vmem:[%s0 + $0x10] sm:$0xff]
    %v49 = vld [vmem:[%s0 + $0x18] sm:$0xff]
    %v50 = vld [vmem:[%s0 + $0x20] sm:$0xff]
    %v51 = vld [vmem:[%s0 + $0x28] sm:$0xff]
    %v52 = vld [vmem:[%s0 + $0x30] sm:$0xff]
    %v53 = vpack.c.bf16 %v46, %v46
    %v54 = vpack.c.bf16 %v47, %v47
    %v55 = vpack.c.bf16 %v48, %v48
    %v56 = vpack.c.bf16 %v49, %v49
    %v57 = vpack.c.bf16 %v50, %v50
    %v58 = vpack.c.bf16 %v51, %v51
    %v59 = vpack.c.bf16 %v52, %v52
    %v60 = vld [vmem:[%s1] sm:$0xf]
    %v61 = vld [vmem:[%s1 + $0x4] sm:$0xf]
    %v62 = vld [vmem:[%s1 + $0x8] sm:$0xf]
    %v63 = vld [vmem:[%s1 + $0xc] sm:$0xf]
    %v64 = vld [vmem:[%s1 + $0x10] sm:$0xf]
    %v65 = vld [vmem:[%s1 + $0x14] sm:$0xf]
    %v66 = vld [vmem:[%s1 + $0x18] sm:$0xf]
    %v67 = vld [vmem:[%s1 + $0x1c] sm:$0xf]
    %v68 = vld [vmem:[%s1 + $0x20] sm:$0xf]
    %v69 = vld [vmem:[%s1 + $0x24] sm:$0xf]
    %v70 = vld [vmem:[%s1 + $0x28] sm:$0xf]
    %v71 = vld [vmem:[%s1 + $0x2c] sm:$0xf]
    %v72 = vld [vmem:[%s1 + $0x30] sm:$0xf]
    %v73 = vld [vmem:[%s1 + $0x34] sm:$0xf]
    %v74 = vld [vmem:[%s1 + $0x38] sm:$0xf]
    %v75 = vld [vmem:[%s1 + $0x3c] sm:$0xf]
    %v76 = vld [vmem:[%s1 + $0x40] sm:$0xf]
    %v77 = vld [vmem:[%s1 + $0x44] sm:$0xf]
    %v78 = vld [vmem:[%s1 + $0x48] sm:$0xf]
    %v79 = vld [vmem:[%s1 + $0x4c] sm:$0xf]
    %v80 = vld [vmem:[%s1 + $0x50] sm:$0xf]
    %v81 = vld [vmem:[%s1 + $0x54] sm:$0xf]
    %v82 = vld [vmem:[%s1 + $0x58] sm:$0xf]
    %v83 = vld [vmem:[%s1 + $0x5c] sm:$0xf]
    %v84 = vld [vmem:[%s1 + $0x60] sm:$0xf]
    %v85 = vld [vmem:[%s1 + $0x64] sm:$0xf]
    %v86 = vld [vmem:[%s1 + $0x68] sm:$0xf]
    %v87 = vld [vmem:[%s1 + $0x6c] sm:$0xf]
    %v88 = vld [vmem:[%s1 + $0x70] sm:$0xf]
    %v89 = vld [vmem:[%s1 + $0x74] sm:$0xf]
    %v90 = vld [vmem:[%s1 + $0x78] sm:$0xf]
    %v91 = vld [vmem:[%s1 + $0x7c] sm:$0xf]
    %v92 = vld [vmem:[%s1 + $0x80] sm:$0xf]
    %v93 = vld [vmem:[%s1 + $0x84] sm:$0xf]
    %v94 = vld [vmem:[%s1 + $0x88] sm:$0xf]
    %v95 = vld [vmem:[%s1 + $0x8c] sm:$0xf]
    %v96 = vld [vmem:[%s1 + $0x90] sm:$0xf]
    %v97 = vld [vmem:[%s1 + $0x94] sm:$0xf]
    %v98 = vld [vmem:[%s1 + $0x98] sm:$0xf]
    %v99 = vld [vmem:[%s1 + $0x9c] sm:$0xf]
    %v100 = vld [vmem:[%s1 + $0xa0] sm:$0xf]
    %v101 = vld [vmem:[%s1 + $0xa4] sm:$0xf]
    %v102 = vld [vmem:[%s1 + $0xa8] sm:$0xf]
    %v103 = vld [vmem:[%s1 + $0xac] sm:$0xf]
    %v104 = vld [vmem:[%s1 + $0xb0] sm:$0xf]
    %v105 = vld [vmem:[%s1 + $0xb4] sm:$0xf]
    %v106 = vld [vmem:[%s1 + $0xb8] sm:$0xf]
    %v107 = vld [vmem:[%s1 + $0xbc] sm:$0xf]
    %v108 = vld [vmem:[%s1 + $0xc0] sm:$0xf]
    %v109 = vld [vmem:[%s1 + $0xc4] sm:$0xf]
    %v110 = vld [vmem:[%s1 + $0xc8] sm:$0xf]
    %v111 = vld [vmem:[%s1 + $0xcc] sm:$0xf]
    %v112 = vld [vmem:[%s1 + $0xd0] sm:$0xf]
    %v113 = vld [vmem:[%s1 + $0xd4] sm:$0xf]
    %v114 = vld [vmem:[%s1 + $0xd8] sm:$0xf]
    %v115 = vld [vmem:[%s1 + $0xdc] sm:$0xf]
    %v116 = vld [vmem:[%s1 + $0xe0] sm:$0xf]
    %v117 = vld [vmem:[%s1 + $0xe4] sm:$0xf]
    %v118 = vld [vmem:[%s1 + $0xe8] sm:$0xf]
    %v119 = vld [vmem:[%s1 + $0xec] sm:$0xf]
    %v120 = vld [vmem:[%s1 + $0xf0] sm:$0xf]
    %v121 = vld [vmem:[%s1 + $0xf4] sm:$0xf]
    %v122 = vld [vmem:[%s1 + $0xf8] sm:$0xf]
    %v123 = vld [vmem:[%s1 + $0xfc] sm:$0xf]
    %v124 = vld [vmem:[%s1 + $0x100] sm:$0xf]
    %v125 = vld [vmem:[%s1 + $0x104] sm:$0xf]
    %v126 = vld [vmem:[%s1 + $0x108] sm:$0xf]
    %v127 = vld [vmem:[%s1 + $0x10c] sm:$0xf]
    %v128 = vld [vmem:[%s1 + $0x110] sm:$0xf]
    %v129 = vld [vmem:[%s1 + $0x114] sm:$0xf]
    %v130 = vld [vmem:[%s1 + $0x118] sm:$0xf]
    %v131 = vld [vmem:[%s1 + $0x11c] sm:$0xf]
    %v132 = vld [vmem:[%s1 + $0x120] sm:$0xf]
    %v133 = vld [vmem:[%s1 + $0x124] sm:$0xf]
    %v134 = vld [vmem:[%s1 + $0x128] sm:$0xf]
    %v135 = vld [vmem:[%s1 + $0x12c] sm:$0xf]
    %v136 = vld [vmem:[%s1 + $0x130] sm:$0xf]
    %v137 = vld [vmem:[%s1 + $0x134] sm:$0xf]
    %v138 = vld [vmem:[%s1 + $0x138] sm:$0xf]
    %v139 = vld [vmem:[%s1 + $0x13c] sm:$0xf]
    %v140 = vld [vmem:[%s1 + $0x140] sm:$0xf]
    %v141 = vld [vmem:[%s1 + $0x144] sm:$0xf]
    %v142 = vld [vmem:[%s1 + $0x148] sm:$0xf]
    %v143 = vld [vmem:[%s1 + $0x14c] sm:$0xf]
    %v144 = vld [vmem:[%s1 + $0x150] sm:$0xf]
    %v145 = vld [vmem:[%s1 + $0x154] sm:$0xf]
    %v146 = vld [vmem:[%s1 + $0x158] sm:$0xf]
    %v147 = vld [vmem:[%s1 + $0x15c] sm:$0xf]
    %v148 = vld [vmem:[%s1 + $0x160] sm:$0xf]
    %v149 = vld [vmem:[%s1 + $0x164] sm:$0xf]
    %v150 = vld [vmem:[%s1 + $0x168] sm:$0xf]
    %v151 = vld [vmem:[%s1 + $0x16c] sm:$0xf]
    %v152 = vld [vmem:[%s1 + $0x170] sm:$0xf]
    %v153 = vld [vmem:[%s1 + $0x174] sm:$0xf]
    %v154 = vld [vmem:[%s1 + $0x178] sm:$0xf]
    %v155 = vld [vmem:[%s1 + $0x17c] sm:$0xf]
    %v156 = vld [vmem:[%s1 + $0x180] sm:$0xf]
    %v157 = vld [vmem:[%s1 + $0x184] sm:$0xf]
    %v158 = vld [vmem:[%s2] sm:$0x1]
    %v160 = vperm.slane %v158, 0
    %v260 = vunpack.c.l.b16 %v60
    %v261 = vunpack.c.l.b16 %v61
    %v262 = vunpack.c.l.b16 %v62
    %v263 = vunpack.c.l.b16 %v63
    %v264 = vunpack.c.l.b16 %v64
    %v265 = vunpack.c.l.b16 %v65
    %v266 = vunpack.c.l.b16 %v66
    %v267 = vunpack.c.l.b16 %v67
    %v268 = vunpack.c.l.b16 %v68
    %v269 = vunpack.c.l.b16 %v69
    %v270 = vunpack.c.l.b16 %v70
    %v271 = vunpack.c.l.b16 %v71
    %v272 = vunpack.c.l.b16 %v72
    %v273 = vunpack.c.l.b16 %v73
    %v274 = vunpack.c.l.b16 %v74
    %v275 = vunpack.c.l.b16 %v75
    %v276 = vunpack.c.l.b16 %v76
    %v277 = vunpack.c.l.b16 %v77
    %v278 = vunpack.c.l.b16 %v78
    %v279 = vunpack.c.l.b16 %v79
    %v280 = vunpack.c.l.b16 %v80
    %v281 = vunpack.c.l.b16 %v81
    %v282 = vunpack.c.l.b16 %v82
    %v283 = vunpack.c.l.b16 %v83
    %v284 = vunpack.c.l.b16 %v84
    %v285 = vunpack.c.l.b16 %v85
    %v286 = vunpack.c.l.b16 %v86
    %v287 = vunpack.c.l.b16 %v87
    %v288 = vunpack.c.l.b16 %v88
    %v289 = vunpack.c.l.b16 %v89
    %v290 = vunpack.c.l.b16 %v90
    %v291 = vunpack.c.l.b16 %v91
    %v292 = vunpack.c.l.b16 %v92
    %v293 = vunpack.c.l.b16 %v93
    %v294 = vunpack.c.l.b16 %v94
    %v295 = vunpack.c.l.b16 %v95
    %v296 = vunpack.c.l.b16 %v96
    %v297 = vunpack.c.l.b16 %v97
    %v298 = vunpack.c.l.b16 %v98
    %v299 = vunpack.c.l.b16 %v99
    %v300 = vunpack.c.l.b16 %v100
    %v301 = vunpack.c.l.b16 %v101
    %v302 = vunpack.c.l.b16 %v102
    %v303 = vunpack.c.l.b16 %v103
    %v304 = vunpack.c.l.b16 %v104
    %v305 = vunpack.c.l.b16 %v105
    %v306 = vunpack.c.l.b16 %v106
    %v307 = vunpack.c.l.b16 %v107
    %v308 = vunpack.c.l.b16 %v108
    %v309 = vunpack.c.l.b16 %v109
    %v310 = vunpack.c.l.b16 %v110
    %v311 = vunpack.c.l.b16 %v111
    %v312 = vunpack.c.l.b16 %v112
    %v313 = vunpack.c.l.b16 %v113
    %v314 = vunpack.c.l.b16 %v114
    %v315 = vunpack.c.l.b16 %v115
    %v316 = vunpack.c.l.b16 %v116
    %v317 = vunpack.c.l.b16 %v117
    %v318 = vunpack.c.l.b16 %v118
    %v319 = vunpack.c.l.b16 %v119
    %v320 = vunpack.c.l.b16 %v120
    %v321 = vunpack.c.l.b16 %v121
    %v322 = vunpack.c.l.b16 %v122
    %v323 = vunpack.c.l.b16 %v123
    %v324 = vunpack.c.l.b16 %v124
    %v325 = vunpack.c.l.b16 %v125
    %v326 = vunpack.c.l.b16 %v126
    %v327 = vunpack.c.l.b16 %v127
    %v328 = vunpack.c.l.b16 %v128
    %v329 = vunpack.c.l.b16 %v129
    %v330 = vunpack.c.l.b16 %v130
    %v331 = vunpack.c.l.b16 %v131
    %v332 = vunpack.c.l.b16 %v132
    %v333 = vunpack.c.l.b16 %v133
    %v334 = vunpack.c.l.b16 %v134
    %v335 = vunpack.c.l.b16 %v135
    %v336 = vunpack.c.l.b16 %v136
    %v337 = vunpack.c.l.b16 %v137
    %v338 = vunpack.c.l.b16 %v138
    %v339 = vunpack.c.l.b16 %v139
    %v340 = vunpack.c.l.b16 %v140
    %v341 = vunpack.c.l.b16 %v141
    %v342 = vunpack.c.l.b16 %v142
    %v343 = vunpack.c.l.b16 %v143
    %v344 = vunpack.c.l.b16 %v144
    %v345 = vunpack.c.l.b16 %v145
    %v346 = vunpack.c.l.b16 %v146
    %v347 = vunpack.c.l.b16 %v147
    %v348 = vunpack.c.l.b16 %v148
    %v349 = vunpack.c.l.b16 %v149
    %v350 = vunpack.c.l.b16 %v150
    %v351 = vunpack.c.l.b16 %v151
    %v352 = vunpack.c.l.b16 %v152
    %v353 = vunpack.c.l.b16 %v153
    %v354 = vunpack.c.l.b16 %v154
    %v355 = vunpack.c.l.b16 %v155
    %v356 = vunpack.c.l.b16 %v156
    %v357 = vunpack.c.l.b16 %v157
    %v358 = vpack.c.b16 %v261, %v260
    %v359 = vpack.c.b16 %v263, %v262
    %v360 = vpack.c.b16 %v265, %v264
    %v361 = vpack.c.b16 %v267, %v266
    %v362 = vpack.c.b16 %v269, %v268
    %v363 = vpack.c.b16 %v271, %v270
    %v364 = vpack.c.b16 %v273, %v272
    %v365 = vpack.c.b16 %v275, %v274
    %v366 = vpack.c.b16 %v277, %v276
    %v367 = vpack.c.b16 %v279, %v278
    %v368 = vpack.c.b16 %v281, %v280
    %v369 = vpack.c.b16 %v283, %v282
    %v370 = vpack.c.b16 %v285, %v284
    %v371 = vpack.c.b16 %v287, %v286
    %v372 = vpack.c.b16 %v289, %v288
    %v373 = vpack.c.b16 %v291, %v290
    %v374 = vpack.c.b16 %v293, %v292
    %v375 = vpack.c.b16 %v295, %v294
    %v376 = vpack.c.b16 %v297, %v296
    %v377 = vpack.c.b16 %v299, %v298
    %v378 = vpack.c.b16 %v301, %v300
    %v379 = vpack.c.b16 %v303, %v302
    %v380 = vpack.c.b16 %v305, %v304
    %v381 = vpack.c.b16 %v307, %v306
    %v382 = vpack.c.b16 %v309, %v308
    %v383 = vpack.c.b16 %v311, %v310
    %v384 = vpack.c.b16 %v313, %v312
    %v385 = vpack.c.b16 %v315, %v314
    %v386 = vpack.c.b16 %v317, %v316
    %v387 = vpack.c.b16 %v319, %v318
    %v388 = vpack.c.b16 %v321, %v320
    %v389 = vpack.c.b16 %v323, %v322
    %v390 = vpack.c.b16 %v325, %v324
    %v391 = vpack.c.b16 %v327, %v326
    %v392 = vpack.c.b16 %v329, %v328
    %v393 = vpack.c.b16 %v331, %v330
    %v394 = vpack.c.b16 %v333, %v332
    %v395 = vpack.c.b16 %v335, %v334
    %v396 = vpack.c.b16 %v337, %v336
    %v397 = vpack.c.b16 %v339, %v338
    %v398 = vpack.c.b16 %v341, %v340
    %v399 = vpack.c.b16 %v343, %v342
    %v400 = vpack.c.b16 %v345, %v344
    %v401 = vpack.c.b16 %v347, %v346
    %v402 = vpack.c.b16 %v349, %v348
    %v403 = vpack.c.b16 %v351, %v350
    %v404 = vpack.c.b16 %v353, %v352
    %v405 = vpack.c.b16 %v355, %v354
    %v406 = vpack.c.b16 %v357, %v356
    %vm456 = vcmask 130048
    %v458 = vsel %vm456, %v59, 0
    %460 = vmatpush.bf16.msra.mxu0 %v365
    %461 = vmatpush.bf16.msra.mxu0 %v364
    %462 = vmatpush.bf16.msra.mxu0 %v363
    %463 = vmatpush.bf16.msra.mxu0 %v362
    %464 = vmatpush.bf16.msra.mxu0 %v361
    %465 = vmatpush.bf16.msra.mxu0 %v360
    %466 = vmatpush.bf16.msra.mxu0 %v359
    %467 = vmatpush.bf16.msra.mxu0 %v358
    %468 = vmatmul.bf16.gmra.mxu0 %v53
    %v469 = vpop.f32.mrf.mxu0
    %v470 = vadd.f32 %v160, %v469
    %v471 = vpop.f32.mrf.mxu0
    %472 = vdwg.mxu0
    %473 = vmatpush.bf16.msra.mxu0 %v373
    %474 = vmatpush.bf16.msra.mxu0 %v372
    %475 = vmatpush.bf16.msra.mxu0 %v371
    %476 = vmatpush.bf16.msra.mxu0 %v370
    %477 = vmatpush.bf16.msra.mxu0 %v369
    %478 = vmatpush.bf16.msra.mxu0 %v368
    %479 = vmatpush.bf16.msra.mxu0 %v367
    %480 = vmatpush.bf16.msra.mxu0 %v366
    %481 = vmatmul.bf16.gmra.mxu0 %v54
    %v482 = vpop.f32.mrf.mxu0
    %v483 = vadd.f32 %v470, %v482
    %v484 = vpop.f32.mrf.mxu0
    %485 = vdwg.mxu0
    %486 = vmatpush.bf16.msra.mxu0 %v381
    %487 = vmatpush.bf16.msra.mxu0 %v380
    %488 = vmatpush.bf16.msra.mxu0 %v379
    %489 = vmatpush.bf16.msra.mxu0 %v378
    %490 = vmatpush.bf16.msra.mxu0 %v377
    %491 = vmatpush.bf16.msra.mxu0 %v376
    %492 = vmatpush.bf16.msra.mxu0 %v375
    %493 = vmatpush.bf16.msra.mxu0 %v374
    %494 = vmatmul.bf16.gmra.mxu0 %v55
    %v495 = vpop.f32.mrf.mxu0
    %v496 = vadd.f32 %v483, %v495
    %v497 = vpop.f32.mrf.mxu0
    %498 = vdwg.mxu0
    %499 = vmatpush.bf16.msra.mxu0 %v389
    %500 = vmatpush.bf16.msra.mxu0 %v388
    %501 = vmatpush.bf16.msra.mxu0 %v387
    %502 = vmatpush.bf16.msra.mxu0 %v386
    %503 = vmatpush.bf16.msra.mxu0 %v385
    %504 = vmatpush.bf16.msra.mxu0 %v384
    %505 = vmatpush.bf16.msra.mxu0 %v383
    %506 = vmatpush.bf16.msra.mxu0 %v382
    %507 = vmatmul.bf16.gmra.mxu0 %v56
    %v508 = vpop.f32.mrf.mxu0
    %v509 = vadd.f32 %v496, %v508
    %v510 = vpop.f32.mrf.mxu0
    %511 = vdwg.mxu0
    %512 = vmatpush.bf16.msra.mxu0 %v397
    %513 = vmatpush.bf16.msra.mxu0 %v396
    %514 = vmatpush.bf16.msra.mxu0 %v395
    %515 = vmatpush.bf16.msra.mxu0 %v394
    %516 = vmatpush.bf16.msra.mxu0 %v393
    %517 = vmatpush.bf16.msra.mxu0 %v392
    %518 = vmatpush.bf16.msra.mxu0 %v391
    %519 = vmatpush.bf16.msra.mxu0 %v390
    %520 = vmatmul.bf16.gmra.mxu0 %v57
    %v521 = vpop.f32.mrf.mxu0
    %v522 = vadd.f32 %v509, %v521
    %v523 = vpop.f32.mrf.mxu0
    %524 = vdwg.mxu0
    %525 = vmatpush.bf16.msra.mxu0 %v405
    %526 = vmatpush.bf16.msra.mxu0 %v404
    %527 = vmatpush.bf16.msra.mxu0 %v403
    %528 = vmatpush.bf16.msra.mxu0 %v402
    %529 = vmatpush.bf16.msra.mxu0 %v401
    %530 = vmatpush.bf16.msra.mxu0 %v400
    %531 = vmatpush.bf16.msra.mxu0 %v399
    %532 = vmatpush.bf16.msra.mxu0 %v398
    %533 = vmatmul.bf16.gmra.mxu0 %v58
    %v534 = vpop.f32.mrf.mxu0
    %v535 = vadd.f32 %v522, %v534
    %v536 = vpop.f32.mrf.mxu0
    %537 = vdwg.mxu0
    %538 = vmatpush.bf16.msra.mxu0 0
    %539 = vmatpush.bf16.msra.mxu0 0
    %540 = vmatpush.bf16.msra.mxu0 0
    %541 = vmatpush.bf16.msra.mxu0 0
    %542 = vmatpush.bf16.msra.mxu0 0
    %543 = vmatpush.bf16.msra.mxu0 0
    %544 = vmatpush.bf16.msra.mxu0 0
    %545 = vmatpush.bf16.msra.mxu0 %v406
    %546 = vmatmul.bf16.gmra.mxu0 %v458
    %v547 = vpop.f32.mrf.mxu0
    %v548 = vadd.f32 %v535, %v547
    %v549 = vpop.f32.mrf.mxu0
    %550 = vdwg.mxu0
    %v551 = vmax.f32 %v548, 0.0
    %v552 = vld [vmem:[%s3] sm:$0xff]
    %v553 = vld [vmem:[%s3 + $0x8] sm:$0xff]
    %v554 = vld [vmem:[%s3 + $0x10] sm:$0xff]
    %v555 = vld [vmem:[%s3 + $0x18] sm:$0xff]
    %v556 = vld [vmem:[%s3 + $0x20] sm:$0xff]
    %v557 = vld [vmem:[%s3 + $0x28] sm:$0xff]
    %v558 = vld [vmem:[%s3 + $0x30] sm:$0xff]
    %v559 = vld [vmem:[%s3 + $0x38] sm:$0xff]
    %v560 = vld [vmem:[%s3 + $0x40] sm:$0xff]
    %v561 = vld [vmem:[%s3 + $0x48] sm:$0xff]
    %v562 = vld [vmem:[%s3 + $0x50] sm:$0xff]
    %v563 = vld [vmem:[%s3 + $0x58] sm:$0xff]
    %v564 = vld [vmem:[%s3 + $0x60] sm:$0xff]
    %v565 = vld [vmem:[%s3 + $0x68] sm:$0xff]
    %v566 = vld [vmem:[%s3 + $0x70] sm:$0xff]
    %v567 = vld [vmem:[%s3 + $0x78] sm:$0xff]
    %v568 = vld [vmem:[%s4] sm:$0x1]
    %v570 = vperm.slane %v568, 0
    %572 = vmatpush.msra.mxu0 %v567
    %573 = vmatpush.msra.mxu0 %v566
    %574 = vmatpush.msra.mxu0 %v565
    %575 = vmatpush.msra.mxu0 %v564
    %576 = vmatpush.msra.mxu0 %v563
    %577 = vmatpush.msra.mxu0 %v562
    %578 = vmatpush.msra.mxu0 %v561
    %579 = vmatpush.msra.mxu0 %v560
    %580 = vmatpush.msra.mxu0 %v559
    %581 = vmatpush.msra.mxu0 %v558
    %582 = vmatpush.msra.mxu0 %v557
    %583 = vmatpush.msra.mxu0 %v556
    %584 = vmatpush.msra.mxu0 %v555
    %585 = vmatpush.msra.mxu0 %v554
    %586 = vmatpush.msra.mxu0 %v553
    %587 = vmatpush.msra.mxu0 %v552
    %588 = vmatmul.f32.gmra.mxu0 %v551
    %v589 = vpop.f32.mrf.mxu0
    %v590 = vadd.f32 %v570, %v589
    %591 = vdwg.mxu0
    %v592 = vmax.f32 %v590, 0.0
    %v593 = vld [vmem:[%s5] sm:$0xff]
    %v594 = vld [vmem:[%s5 + $0x8] sm:$0xff]
    %v595 = vld [vmem:[%s5 + $0x10] sm:$0xff]
    %v596 = vld [vmem:[%s5 + $0x18] sm:$0xff]
    %v597 = vld [vmem:[%s5 + $0x20] sm:$0xff]
    %v598 = vld [vmem:[%s5 + $0x28] sm:$0xff]
    %v599 = vld [vmem:[%s5 + $0x30] sm:$0xff]
    %v600 = vld [vmem:[%s5 + $0x38] sm:$0xff]
    %v601 = vld [vmem:[%s6] sm:$0x1]
    %v603 = vperm.slane %v601, 0
    %vm605 = vcmask 523264
    %v607 = vsel %vm605, %v592, 0
    %609 = vmatpush.msra.mxu0 0.0
    %610 = vmatpush.msra.mxu0 0.0
    %611 = vmatpush.msra.mxu0 0.0
    %612 = vmatpush.msra.mxu0 0.0
    %613 = vmatpush.msra.mxu0 0.0
    %614 = vmatpush.msra.mxu0 0.0
    %615 = vmatpush.msra.mxu0 0.0
    %616 = vmatpush.msra.mxu0 0.0
    %617 = vmatpush.msra.mxu0 %v600
    %618 = vmatpush.msra.mxu0 %v599
    %619 = vmatpush.msra.mxu0 %v598
    %620 = vmatpush.msra.mxu0 %v597
    %621 = vmatpush.msra.mxu0 %v596
    %622 = vmatpush.msra.mxu0 %v595
    %623 = vmatpush.msra.mxu0 %v594
    %624 = vmatpush.msra.mxu0 %v593
    %625 = vmatmul.f32.gmra.mxu0 %v607
    %v626 = vpop.f32.mrf.mxu0
    %v627 = vadd.f32 %v603, %v626
    %628 = vdwg.mxu0
    %v629 = vmax.f32 %v627, 0.0
    %v630 = vld [vmem:[%s7] sm:$0xff]
    %v631 = vld [vmem:[%s7 + $0x8] sm:$0xff]
    %v632 = vld [vmem:[%s7 + $0x10] sm:$0xff]
    %v633 = vld [vmem:[%s7 + $0x18] sm:$0xff]
    %v634 = vld [vmem:[%s7 + $0x20] sm:$0xff]
    %v635 = vld [vmem:[%s7 + $0x28] sm:$0xff]
    %v636 = vld [vmem:[%s7 + $0x30] sm:$0xff]
    %v637 = vld [vmem:[%s7 + $0x38] sm:$0xff]
    %v638 = vld [vmem:[%s7 + $0x40] sm:$0xff]
    %v639 = vld [vmem:[%s7 + $0x48] sm:$0xff]
    %v640 = vld [vmem:[%s7 + $0x50] sm:$0xff]
    %v641 = vld [vmem:[%s7 + $0x58] sm:$0xff]
    %v642 = vld [vmem:[%s7 + $0x60] sm:$0xff]
    %v643 = vld [vmem:[%s7 + $0x68] sm:$0xff]
    %v644 = vld [vmem:[%s7 + $0x70] sm:$0xff]
    %v645 = vld [vmem:[%s7 + $0x78] sm:$0xff]
    %v646 = vld [vmem:[%s8] sm:$0x1]
    %v648 = vperm.slane %v646, 0
    %650 = vmatpush.msra.mxu0 %v645
    %651 = vmatpush.msra.mxu0 %v644
    %652 = vmatpush.msra.mxu0 %v643
    %653 = vmatpush.msra.mxu0 %v642
    %654 = vmatpush.msra.mxu0 %v641
    %655 = vmatpush.msra.mxu0 %v640
    %656 = vmatpush.msra.mxu0 %v639
    %657 = vmatpush.msra.mxu0 %v638
    %658 = vmatpush.msra.mxu0 %v637
    %659 = vmatpush.msra.mxu0 %v636
    %660 = vmatpush.msra.mxu0 %v635
    %661 = vmatpush.msra.mxu0 %v634
    %662 = vmatpush.msra.mxu0 %v633
    %663 = vmatpush.msra.mxu0 %v632
    %664 = vmatpush.msra.mxu0 %v631
    %665 = vmatpush.msra.mxu0 %v630
    %666 = vmatmul.f32.gmra.mxu0 %v629
    %v667 = vpop.f32.mrf.mxu0
    %v668 = vadd.f32 %v648, %v667
    %669 = vdwg.mxu0
    %v670 = vmax.f32 %v668, 0.0
    %v671 = vld [vmem:[%s9] sm:$0xff]
    %v672 = vld [vmem:[%s9 + $0x8] sm:$0xff]
    %v673 = vld [vmem:[%s9 + $0x10] sm:$0xff]
    %v674 = vld [vmem:[%s9 + $0x18] sm:$0xff]
    %v675 = vld [vmem:[%s9 + $0x20] sm:$0xff]
    %v676 = vld [vmem:[%s9 + $0x28] sm:$0xff]
    %v677 = vld [vmem:[%s9 + $0x30] sm:$0xff]
    %v678 = vld [vmem:[%s9 + $0x38] sm:$0xff]
    %v679 = vld [vmem:[%s9 + $0x40] sm:$0xff]
    %v680 = vld [vmem:[%s9 + $0x48] sm:$0xff]
    %v681 = vld [vmem:[%s9 + $0x50] sm:$0xff]
    %v682 = vld [vmem:[%s9 + $0x58] sm:$0xff]
    %v683 = vld [vmem:[%s9 + $0x60] sm:$0xff]
    %v684 = vld [vmem:[%s9 + $0x68] sm:$0xff]
    %v685 = vld [vmem:[%s9 + $0x70] sm:$0xff]
    %v686 = vld [vmem:[%s9 + $0x78] sm:$0xff]
    %v687 = vld [vmem:[%s10] sm:$0x1]
    %v689 = vperm.slane %v687, 0
    %691 = vmatpush.msra.mxu0 %v686
    %692 = vmatpush.msra.mxu0 %v685
    %693 = vmatpush.msra.mxu0 %v684
    %694 = vmatpush.msra.mxu0 %v683
    %695 = vmatpush.msra.mxu0 %v682
    %696 = vmatpush.msra.mxu0 %v681
    %697 = vmatpush.msra.mxu0 %v680
    %698 = vmatpush.msra.mxu0 %v679
    %699 = vmatpush.msra.mxu0 %v678
    %700 = vmatpush.msra.mxu0 %v677
    %701 = vmatpush.msra.mxu0 %v676
    %702 = vmatpush.msra.mxu0 %v675
    %703 = vmatpush.msra.mxu0 %v674
    %704 = vmatpush.msra.mxu0 %v673
    %705 = vmatpush.msra.mxu0 %v672
    %706 = vmatpush.msra.mxu0 %v671
    %707 = vmatmul.f32.gmra.mxu0 %v670
    %v708 = vpop.f32.mrf.mxu0
    %v709 = vadd.f32 %v689, %v708
    %710 = vdwg.mxu0
    %v711 = vmax.f32 %v709, 0.0
    %v712 = vld [vmem:[%s11] sm:$0xff]
    %v713 = vld [vmem:[%s11 + $0x8] sm:$0xff]
    %v714 = vld [vmem:[%s11 + $0x10] sm:$0xff]
    %v715 = vld [vmem:[%s11 + $0x18] sm:$0xff]
    %v716 = vld [vmem:[%s11 + $0x20] sm:$0xff]
    %v717 = vld [vmem:[%s11 + $0x28] sm:$0xff]
    %v718 = vld [vmem:[%s11 + $0x30] sm:$0xff]
    %v719 = vld [vmem:[%s11 + $0x38] sm:$0xff]
    %v720 = vld [vmem:[%s11 + $0x40] sm:$0xff]
    %v721 = vld [vmem:[%s11 + $0x48] sm:$0xff]
    %v722 = vld [vmem:[%s11 + $0x50] sm:$0xff]
    %v723 = vld [vmem:[%s11 + $0x58] sm:$0xff]
    %v724 = vld [vmem:[%s11 + $0x60] sm:$0xff]
    %v725 = vld [vmem:[%s11 + $0x68] sm:$0xff]
    %v726 = vld [vmem:[%s11 + $0x70] sm:$0xff]
    %v727 = vld [vmem:[%s11 + $0x78] sm:$0xff]
    %v728 = vld [vmem:[%s12] sm:$0x1]
    %v730 = vperm.slane %v728, 0
    %732 = vmatpush.msra.mxu0 %v727
    %733 = vmatpush.msra.mxu0 %v726
    %734 = vmatpush.msra.mxu0 %v725
    %735 = vmatpush.msra.mxu0 %v724
    %736 = vmatpush.msra.mxu0 %v723
    %737 = vmatpush.msra.mxu0 %v722
    %738 = vmatpush.msra.mxu0 %v721
    %739 = vmatpush.msra.mxu0 %v720
    %740 = vmatpush.msra.mxu0 %v719
    %741 = vmatpush.msra.mxu0 %v718
    %742 = vmatpush.msra.mxu0 %v717
    %743 = vmatpush.msra.mxu0 %v716
    %744 = vmatpush.msra.mxu0 %v715
    %745 = vmatpush.msra.mxu0 %v714
    %746 = vmatpush.msra.mxu0 %v713
    %747 = vmatpush.msra.mxu0 %v712
    %748 = vmatmul.f32.gmra.mxu0 %v711
    %v749 = vpop.f32.mrf.mxu0
    %v750 = vadd.f32 %v730, %v749
    %751 = vdwg.mxu0
    %vm752 = vcmask 80896
    %v753 = vsel %vm752, %v750, -inf
    %754 = vmax.xlane.f32.xlu0 %v753
    %v755 = vpop.xlane.xlu0 %754
    %v756 = vsub.f32 %v750, %v755
    %v757 = vmul.f32 %v756, 1.442695
    %v758 = vpow.pop %v757
    %v759 = vsel %vm752, %v758, 0.0
    %760 = vadd.xlane.f32.xlu0 %v759
    %v761 = vpop.xlane.xlu0 %760
    %v762 = vlog2.pop %v761
    %v763 = vmul.f32 %v762, 0.6931472
    %v764 = vsub.f32 %v756, %v763
    %765 = vst.msk [vmem:[#allocation2] sm:$0xff] %vm752, %v764
    // Predicated region
    $region54: #{neural_network_d_forward.1} parent=1 // pred_check
      _
    $region55: #{neural_network_d_forward.1} parent=1 // pred_check_branch
      %767 = sbr.rel (0) target = $region57
    $region56: #{neural_network_d_forward.1} parent=1 // pred_region
      %769 = vsyncadd [#allocation3], 0
      %s771 = sshll.u32 [#allocation2], 4
      %s772 = int_to_ptr.vmem [resolvable:$true] %s771
      %s773 = sshll.u32 %s13, 4
      %s774 = int_to_ptr.hbm [resolvable:$true] %s773
      %776 = dma.vmem_to_hbm [thread:$0]  %s772, 128, %s774, [#allocation3]
    $region57: #{neural_network_d_forward.1} parent=1 // pred_fallthru
      _
    // Predicated region
    $region58: #{neural_network_d_forward.1} parent=1 // pred_check
      _
    $region59: #{neural_network_d_forward.1} parent=1 // pred_check_branch
      %778 = sbr.rel (0) target = $region61
    $region60: #{neural_network_d_forward.1} parent=1 // pred_region
      %780 = dma.done [#allocation3], 128
    $region61: #{neural_network_d_forward.1} parent=1 // pred_fallthru
      _
    %781 = vsyncpa [#allocation3], 1

</llo_original>
